<compile_context>
chip_gen: v6e
topology: v6e:2x2x1
jax: 0.10.0
libtpu: 0.0.40
codegen_flags: <defaults>
</compile_context>

<pallas_src>
import functools

import jax
import jax.numpy as jnp
from jax.experimental import pallas as pl
from jax.experimental.pallas import tpu as pltpu

LANE = 128        # padded hidden width (vreg lane dim)
SUBLANE = 8
IN_F = 4          # Flatten() of a (2, 2) sample
HID = 5
OUT_F = 4
DEFAULT_TB = 512  # batch rows per grid step (review: 512-2048 is the sweet spot)


def _ffnet_kernel(x_ref, w1_ref, b1_ref, w2_ref, b2_ref, o_ref):
    # x_ref: (TB, 4)   w1_ref: (4, 128)   b1_ref: (1, 128)
    # w2_ref: (128, 4) b2_ref: (1, 4)     o_ref: (TB, 4)
    # h = relu(x @ W1 + b1)  -- narrow contraction (4) is padded internally by Mosaic.
    h = jnp.dot(x_ref[...], w1_ref[...], preferred_element_type=jnp.float32)   # (TB, 128)
    h = jnp.maximum(h + b1_ref[...], 0.0)
    # o = h @ W2 + b2        -- narrow (4-lane) output, masked store (cheap).
    o = jnp.dot(h, w2_ref[...], preferred_element_type=jnp.float32)            # (TB, 4)
    o_ref[...] = o + b2_ref[...]


def prepare_params(params):
    """Pad the tiny FFNet weights once; cache the result and reuse across forwards."""
    w1, b1, w2, b2 = params  # (4,5), (5,), (5,4), (4,)
    w1_p = jnp.zeros((IN_F, LANE), jnp.float32).at[:, :HID].set(w1.astype(jnp.float32))
    b1_p = jnp.zeros((1, LANE), jnp.float32).at[0, :HID].set(b1.astype(jnp.float32))
    w2_p = jnp.zeros((LANE, OUT_F), jnp.float32).at[:HID, :].set(w2.astype(jnp.float32))
    b2_p = b2.astype(jnp.float32).reshape(1, OUT_F)
    return (w1_p, b1_p, w2_p, b2_p)


@functools.partial(jax.jit, static_argnames=("tb",))
def model1_forward(x, prepared, tb=DEFAULT_TB):
    """x: any shape with leading batch dim; flattened features must equal 4."""
    w1_p, b1_p, w2_p, b2_p = prepared
    b = x.shape[0]
    x2 = x.reshape(b, -1).astype(jnp.float32)            # Flatten -> (B, 4)
    assert x2.shape[1] == IN_F, x2.shape

    # Batch tiling: multiple of 8 sublanes, capped at tb; pad batch rows (only) to a
    # whole number of tiles.
    bp8 = ((b + SUBLANE - 1) // SUBLANE) * SUBLANE
    tb = min(tb, bp8)
    n_blocks = pl.cdiv(bp8, tb)
    bp = n_blocks * tb
    if bp != b:
        x2 = jnp.pad(x2, ((0, bp - b), (0, 0)))

    out_p = pl.pallas_call(
        _ffnet_kernel,
        out_shape=jax.ShapeDtypeStruct((bp, OUT_F), jnp.float32),
        grid=(n_blocks,),
        in_specs=[
            pl.BlockSpec((tb, IN_F), lambda i: (i, 0)),      # x: streamed batch tiles
            pl.BlockSpec((IN_F, LANE), lambda i: (0, 0)),    # W1: VMEM-resident
            pl.BlockSpec((1, LANE), lambda i: (0, 0)),       # b1
            pl.BlockSpec((LANE, OUT_F), lambda i: (0, 0)),   # W2
            pl.BlockSpec((1, OUT_F), lambda i: (0, 0)),      # b2
        ],
        out_specs=pl.BlockSpec((tb, OUT_F), lambda i: (i, 0)),
        compiler_params=pltpu.CompilerParams(
            dimension_semantics=("parallel",),
        ),
    )(x2, w1_p, b1_p, w2_p, b2_p)

    out = out_p[:b] if bp != b else out_p                 # drop padded batch rows
    return out.reshape(-1, 2, 2)                          # .reshape(-1, 2, 2)


def init_params(key):
    """Deterministic PyTorch-Linear-style init (uniform(-1/sqrt(fan_in), +))."""
    k1, k2, k3, k4 = jax.random.split(key, 4)
    lim1 = 1.0 / jnp.sqrt(4.0)
    lim2 = 1.0 / jnp.sqrt(5.0)
    w1 = jax.random.uniform(k1, (4, 5), jnp.float32, -lim1, lim1)
    b1 = jax.random.uniform(k2, (5,), jnp.float32, -lim1, lim1)
    w2 = jax.random.uniform(k3, (5, 4), jnp.float32, -lim2, lim2)
    b2 = jax.random.uniform(k4, (4,), jnp.float32, -lim2, lim2)
    return (w1, b1, w2, b2)


def model1_reference(x, params):
    w1, b1, w2, b2 = params
    h = jnp.maximum(x.reshape(x.shape[0], -1) @ w1 + b1, 0.0)
    return (h @ w2 + b2).reshape(-1, 2, 2)


if __name__ == "__main__":
    key = jax.random.PRNGKey(0)
    kx, kx2, kp = jax.random.split(key, 3)
    params = init_params(kp)
    prepared = prepare_params(params)   # padded weights cached once

    # batch=8, per-sample shape (2, 2) -> Flatten gives 4 features
    x = jax.random.normal(kx, (8, 2, 2), jnp.float32)
    out = jax.block_until_ready(model1_forward(x, prepared))
    ref = model1_reference(x, params)
    assert out.shape == (8, 2, 2), out.shape
    assert jnp.allclose(out, ref, atol=1e-5, rtol=1e-5), "mismatch vs reference (b=8)"

    # batch=13 (not a multiple of 8) with tb=8 -> exercises batch padding + 2-step grid
    x2 = jax.random.normal(kx2, (13, 2, 2), jnp.float32)
    out2 = jax.block_until_ready(model1_forward(x2, prepared, tb=8))
    ref2 = model1_reference(x2, params)
    assert out2.shape == (13, 2, 2), out2.shape
    assert jnp.allclose(out2, ref2, atol=1e-5, rtol=1e-5), "mismatch vs reference (b=13)"

    print("KERNEL_OK")
</pallas_src>

<mosaic_0001>
module attributes {stable_mosaic.version = 11 : i64} {
  func.func @_ffnet_kernel(%arg0: i32, %arg1: memref<8x4xf32, #tpu.memory_space<vmem>>, %arg2: memref<4x128xf32, #tpu.memory_space<vmem>>, %arg3: memref<1x128xf32, #tpu.memory_space<vmem>>, %arg4: memref<128x4xf32, #tpu.memory_space<vmem>>, %arg5: memref<1x4xf32, #tpu.memory_space<vmem>>, %arg6: memref<8x4xf32, #tpu.memory_space<vmem>>) attributes {dimension_semantics = [#tpu.dimension_semantics<parallel>], iteration_bounds = array<i64: 1>, scalar_prefetch = 0 : i64, scratch_operands = 0 : i64, tpu.core_type = #tpu.core_type<tc>, window_params = [{transform_indices = @transform_0, window_bounds = array<i64: 8, 4>}, {pipeline_mode = #tpu.pipeline_mode<synchronous>, transform_indices = @transform_1, window_bounds = array<i64: 4, 128>}, {pipeline_mode = #tpu.pipeline_mode<synchronous>, transform_indices = @transform_2, window_bounds = array<i64: 1, 128>}, {pipeline_mode = #tpu.pipeline_mode<synchronous>, transform_indices = @transform_3, window_bounds = array<i64: 128, 4>}, {pipeline_mode = #tpu.pipeline_mode<synchronous>, transform_indices = @transform_4, window_bounds = array<i64: 1, 4>}, {transform_indices = @transform_5, window_bounds = array<i64: 8, 4>}]} {
    %c0 = arith.constant 0 : index
    %c0_0 = arith.constant 0 : index
    %0 = vector.load %arg1[%c0, %c0_0] : memref<8x4xf32, #tpu.memory_space<vmem>>, vector<8x4xf32>
    %c0_1 = arith.constant 0 : index
    %c0_2 = arith.constant 0 : index
    %1 = vector.load %arg2[%c0_1, %c0_2] : memref<4x128xf32, #tpu.memory_space<vmem>>, vector<4x128xf32>
    %cst = arith.constant dense<0.000000e+00> : vector<8x128xf32>
    %2 = tpu.matmul %0, %1, %cst {dimension_numbers = #tpu.dot_dimension_numbers<[1], [0], [0], [1], [0, 0, 1, 1], [], []>} : vector<8x4xf32>, vector<4x128xf32>, vector<8x128xf32> -> vector<8x128xf32>
    %c0_3 = arith.constant 0 : index
    %c0_4 = arith.constant 0 : index
    %3 = vector.load %arg3[%c0_3, %c0_4] : memref<1x128xf32, #tpu.memory_space<vmem>>, vector<1x128xf32>
    %4 = vector.broadcast %3 : vector<1x128xf32> to vector<8x128xf32>
    %5 = arith.addf %2, %4 : vector<8x128xf32>
    %cst_5 = arith.constant 0.000000e+00 : f32
    %6 = vector.broadcast %cst_5 : f32 to vector<8x128xf32>
    %7 = arith.maximumf %5, %6 : vector<8x128xf32>
    %c0_6 = arith.constant 0 : index
    %c0_7 = arith.constant 0 : index
    %8 = vector.load %arg4[%c0_6, %c0_7] : memref<128x4xf32, #tpu.memory_space<vmem>>, vector<128x4xf32>
    %cst_8 = arith.constant dense<0.000000e+00> : vector<8x4xf32>
    %9 = tpu.matmul %7, %8, %cst_8 {dimension_numbers = #tpu.dot_dimension_numbers<[1], [0], [0], [1], [0, 0, 1, 1], [], []>} : vector<8x128xf32>, vector<128x4xf32>, vector<8x4xf32> -> vector<8x4xf32>
    %c0_9 = arith.constant 0 : index
    %c0_10 = arith.constant 0 : index
    %10 = vector.load %arg5[%c0_9, %c0_10] : memref<1x4xf32, #tpu.memory_space<vmem>>, vector<1x4xf32>
    %11 = vector.broadcast %10 : vector<1x4xf32> to vector<8x4xf32>
    %12 = arith.addf %9, %11 : vector<8x4xf32>
    %c0_11 = arith.constant 0 : index
    %c0_12 = arith.constant 0 : index
    %13 = vector.load %arg6[%c0_11, %c0_12] : memref<8x4xf32, #tpu.memory_space<vmem>>, vector<8x4xf32>
    tpu.vector_store %arg6[%c0_11, %c0_12], %12 {strides = array<i32>} : memref<8x4xf32, #tpu.memory_space<vmem>>, vector<8x4xf32>,
    return
  }
  func.func @transform_0(%arg0: i32) -> (i32, i32) {
    %c0_i32 = arith.constant 0 : i32
    %c0_i32_0 = arith.constant 0 : i32
    return %arg0, %c0_i32 : i32, i32
  }
  func.func @transform_1(%arg0: i32) -> (i32, i32) {
    %c0_i32 = arith.constant 0 : i32
    %c0_i32_0 = arith.constant 0 : i32
    %c0_i32_1 = arith.constant 0 : i32
    return %c0_i32, %c0_i32_0 : i32, i32
  }
  func.func @transform_2(%arg0: i32) -> (i32, i32) {
    %c0_i32 = arith.constant 0 : i32
    %c0_i32_0 = arith.constant 0 : i32
    %c0_i32_1 = arith.constant 0 : i32
    return %c0_i32, %c0_i32_0 : i32, i32
  }
  func.func @transform_3(%arg0: i32) -> (i32, i32) {
    %c0_i32 = arith.constant 0 : i32
    %c0_i32_0 = arith.constant 0 : i32
    %c0_i32_1 = arith.constant 0 : i32
    return %c0_i32, %c0_i32_0 : i32, i32
  }
  func.func @transform_4(%arg0: i32) -> (i32, i32) {
    %c0_i32 = arith.constant 0 : i32
    %c0_i32_0 = arith.constant 0 : i32
    %c0_i32_1 = arith.constant 0 : i32
    return %c0_i32, %c0_i32_0 : i32, i32
  }
  func.func @transform_5(%arg0: i32) -> (i32, i32) {
    %c0_i32 = arith.constant 0 : i32
    %c0_i32_0 = arith.constant 0 : i32
    return %arg0, %c0_i32 : i32, i32
  }
}

</mosaic_0001>

<llo_original>
// kernel: model1_forward.1
$region0: #{model1_forward.1}
  #allocation0 [shape = 'u32[]', space=smem, size = 0x4, offset = 0x4, fixed_abs, tag = 'smem constant byte address 0x4 - core index']
  #allocation1 [shape = 'u32[144,128]{1,0:T(1,128)}', space=vmem, size = 0x12000, scoped, tag = 'internal scratch']
  %s0 = inlined_call_operand.vmem [shape: f32[8,4], index: 0, kind: input, shape index: {}]
  %s1 = inlined_call_operand.vmem [shape: f32[4,128], index: 1, kind: input, shape index: {}]
  %s2 = inlined_call_operand.vmem [shape: f32[1,128], index: 2, kind: input, shape index: {}]
  %s3 = inlined_call_operand.vmem [shape: f32[128,4], index: 3, kind: input, shape index: {}]
  %s4 = inlined_call_operand.vmem [shape: f32[1,4], index: 4, kind: input, shape index: {}]
  %s5 = inlined_call_operand.vmem [shape: f32[8,4], index: 5, kind: output, shape index: {}]
  %s6 = sld [smem:[#allocation0]]
  $region30: #{model1_forward.1} parent=0
    _
  %s8 = ssub.s32 1, %s6
  %s9 = scalar_select 0, %s8, %s6
  // Predicated region
  $region2: #{model1_forward.1} parent=0 // pred_check
    _
  $region3: #{model1_forward.1} parent=0 // pred_check_branch
    %11 = sbr.rel (0) target = $region5
  $region4: #{model1_forward.1} parent=0 // pred_region
    _
  $region5: #{model1_forward.1} parent=0 // pred_fallthru
    _
  // Predicated region
  $region6: #{model1_forward.1} parent=0 // pred_check
    _
  $region7: #{model1_forward.1} parent=0 // pred_check_branch
    %13 = sbr.rel (0) target = $region9
  $region8: #{model1_forward.1} parent=0 // pred_region
    _
  $region9: #{model1_forward.1} parent=0 // pred_fallthru
    _
  // Predicated region
  $region10: #{model1_forward.1} parent=0 // pred_check
    _
  $region11: #{model1_forward.1} parent=0 // pred_check_branch
    %15 = sbr.rel (0) target = $region13
  $region12: #{model1_forward.1} parent=0 // pred_region
    _
  $region13: #{model1_forward.1} parent=0 // pred_fallthru
    _
  // Predicated region
  $region14: #{model1_forward.1} parent=0 // pred_check
    _
  $region15: #{model1_forward.1} parent=0 // pred_check_branch
    %17 = sbr.rel (0) target = $region17
  $region16: #{model1_forward.1} parent=0 // pred_region
    _
  $region17: #{model1_forward.1} parent=0 // pred_fallthru
    _
  // Predicated region
  $region18: #{model1_forward.1} parent=0 // pred_check
    _
  $region19: #{model1_forward.1} parent=0 // pred_check_branch
    %19 = sbr.rel (0) target = $region21
  $region20: #{model1_forward.1} parent=0 // pred_region
    _
  $region21: #{model1_forward.1} parent=0 // pred_fallthru
    _
  %v20 = vld [vmem:[%s0] sm:$0xff]
  %v21 = vld [vmem:[%s1] sm:$0xf]
  %v22 = vld [vmem:[%s2] sm:$0x1]
  %v24 = vlaneseq
  %v25 = vshrl.u32 %v24, 7
  %v26 = vsub.s32 0, %v25
  %v27 = vrot.slane %v22, %v26
  %vm29 = vcmask 31744
  %v31 = vsel %vm29, %v20, 0
  %vm33 = vcmask 1043456
  %v35 = vsel %vm33, %v21, 0
  %37 = vmatprep.subr.mxu0 0.0
  %38 = vmatpush1.msra.mxu0 0.0
  %39 = vmatprep.subr.mxu0 0.0
  %40 = vmatpush1.msra.mxu0 0.0
  %41 = vmatprep.subr.mxu0 0.0
  %42 = vmatpush1.msra.mxu0 0.0
  %43 = vmatprep.subr.mxu0 0.0
  %44 = vmatpush1.msra.mxu0 0.0
  %45 = vmatprep.subr.mxu0 0.0
  %46 = vmatpush1.msra.mxu0 0.0
  %47 = vmatprep.subr.mxu0 0.0
  %48 = vmatpush1.msra.mxu0 0.0
  %49 = vmatprep.subr.mxu0 0.0
  %50 = vmatpush1.msra.mxu0 0.0
  %51 = vmatprep.subr.mxu0 0.0
  %52 = vmatpush1.msra.mxu0 0.0
  %53 = vmatprep.subr.mxu0 0.0
  %54 = vmatpush1.msra.mxu0 0.0
  %55 = vmatprep.subr.mxu0 0.0
  %56 = vmatpush1.msra.mxu0 0.0
  %57 = vmatprep.subr.mxu0 0.0
  %58 = vmatpush1.msra.mxu0 0.0
  %59 = vmatprep.subr.mxu0 0.0
  %60 = vmatpush1.msra.mxu0 0.0
  %61 = vmatprep.subr.mxu0 0.0
  %62 = vmatpush1.msra.mxu0 0.0
  %63 = vmatprep.subr.mxu0 0.0
  %64 = vmatpush1.msra.mxu0 0.0
  %65 = vmatprep.subr.mxu0 0.0
  %66 = vmatpush1.msra.mxu0 0.0
  %67 = vmatprep.subr.mxu0 0.0
  %68 = vmatpush1.msra.mxu0 %v35
  %69 = vmatprep.subr.mxu0 0.0
  %70 = vmatpush2.msra.mxu0 0.0
  %71 = vmatprep.subr.mxu0 0.0
  %72 = vmatpush2.msra.mxu0 0.0
  %73 = vmatprep.subr.mxu0 0.0
  %74 = vmatpush2.msra.mxu0 0.0
  %75 = vmatprep.subr.mxu0 0.0
  %76 = vmatpush2.msra.mxu0 0.0
  %77 = vmatprep.subr.mxu0 0.0
  %78 = vmatpush2.msra.mxu0 0.0
  %79 = vmatprep.subr.mxu0 0.0
  %80 = vmatpush2.msra.mxu0 0.0
  %81 = vmatprep.subr.mxu0 0.0
  %82 = vmatpush2.msra.mxu0 0.0
  %83 = vmatprep.subr.mxu0 0.0
  %84 = vmatpush2.msra.mxu0 0.0
  %85 = vmatprep.subr.mxu0 0.0
  %86 = vmatpush2.msra.mxu0 0.0
  %87 = vmatprep.subr.mxu0 0.0
  %88 = vmatpush2.msra.mxu0 0.0
  %89 = vmatprep.subr.mxu0 0.0
  %90 = vmatpush2.msra.mxu0 0.0
  %91 = vmatprep.subr.mxu0 0.0
  %92 = vmatpush2.msra.mxu0 0.0
  %93 = vmatprep.subr.mxu0 0.0
  %94 = vmatpush2.msra.mxu0 0.0
  %95 = vmatprep.subr.mxu0 0.0
  %96 = vmatpush2.msra.mxu0 0.0
  %97 = vmatprep.subr.mxu0 0.0
  %98 = vmatpush2.msra.mxu0 0.0
  %99 = vmatprep.subr.mxu0 0.0
  %100 = vmatpush2.msra.mxu0 0.0
  %101 = vmatprep.mubr.f32.mxu0 0.0
  %102 = vmatmul.mubr.f32.gmra.mxu0 %v31
  %v103 = vpop.f32.mrf.mxu0
  %v104 = vadd.f32 %v27, %v103
  %v105 = vpop.f32.mrf.mxu0
  %106 = vdwg.mxu0
  %v107 = vmax.f32 %v104, 0.0
  %v108 = vld [vmem:[%s3] sm:$0xff]
  %v109 = vld [vmem:[%s3 + $0x8] sm:$0xff]
  %v110 = vld [vmem:[%s3 + $0x10] sm:$0xff]
  %v111 = vld [vmem:[%s3 + $0x18] sm:$0xff]
  %v112 = vld [vmem:[%s3 + $0x20] sm:$0xff]
  %v113 = vld [vmem:[%s3 + $0x28] sm:$0xff]
  %v114 = vld [vmem:[%s3 + $0x30] sm:$0xff]
  %v115 = vld [vmem:[%s3 + $0x38] sm:$0xff]
  %v116 = vld [vmem:[%s3 + $0x40] sm:$0xff]
  %v117 = vld [vmem:[%s3 + $0x48] sm:$0xff]
  %v118 = vld [vmem:[%s3 + $0x50] sm:$0xff]
  %v119 = vld [vmem:[%s3 + $0x58] sm:$0xff]
  %v120 = vld [vmem:[%s3 + $0x60] sm:$0xff]
  %v121 = vld [vmem:[%s3 + $0x68] sm:$0xff]
  %v122 = vld [vmem:[%s3 + $0x70] sm:$0xff]
  %v123 = vld [vmem:[%s3 + $0x78] sm:$0xff]
  %v124 = vld [vmem:[%s4] sm:$0x1]
  %v126 = vlaneseq
  %v127 = vshrl.u32 %v126, 7
  %v128 = vsub.s32 0, %v127
  %v129 = vrot.slane %v124, %v128
  %131 = vmatprep.subr.mxu0 0.0
  %132 = vmatpush1.msra.mxu0 %v123
  %133 = vmatprep.subr.mxu0 0.0
  %134 = vmatpush1.msra.mxu0 %v122
  %135 = vmatprep.subr.mxu0 0.0
  %136 = vmatpush1.msra.mxu0 %v121
  %137 = vmatprep.subr.mxu0 0.0
  %138 = vmatpush1.msra.mxu0 %v120
  %139 = vmatprep.subr.mxu0 0.0
  %140 = vmatpush1.msra.mxu0 %v119
  %141 = vmatprep.subr.mxu0 0.0
  %142 = vmatpush1.msra.mxu0 %v118
  %143 = vmatprep.subr.mxu0 0.0
  %144 = vmatpush1.msra.mxu0 %v117
  %145 = vmatprep.subr.mxu0 0.0
  %146 = vmatpush1.msra.mxu0 %v116
  %147 = vmatprep.subr.mxu0 0.0
  %148 = vmatpush1.msra.mxu0 %v115
  %149 = vmatprep.subr.mxu0 0.0
  %150 = vmatpush1.msra.mxu0 %v114
  %151 = vmatprep.subr.mxu0 0.0
  %152 = vmatpush1.msra.mxu0 %v113
  %153 = vmatprep.subr.mxu0 0.0
  %154 = vmatpush1.msra.mxu0 %v112
  %155 = vmatprep.subr.mxu0 0.0
  %156 = vmatpush1.msra.mxu0 %v111
  %157 = vmatprep.subr.mxu0 0.0
  %158 = vmatpush1.msra.mxu0 %v110
  %159 = vmatprep.subr.mxu0 0.0
  %160 = vmatpush1.msra.mxu0 %v109
  %161 = vmatprep.subr.mxu0 0.0
  %162 = vmatpush1.msra.mxu0 %v108
  %163 = vmatprep.subr.mxu0 0.0
  %164 = vmatpush2.msra.mxu0 0.0
  %165 = vmatprep.subr.mxu0 0.0
  %166 = vmatpush2.msra.mxu0 0.0
  %167 = vmatprep.subr.mxu0 0.0
  %168 = vmatpush2.msra.mxu0 0.0
  %169 = vmatprep.subr.mxu0 0.0
  %170 = vmatpush2.msra.mxu0 0.0
  %171 = vmatprep.subr.mxu0 0.0
  %172 = vmatpush2.msra.mxu0 0.0
  %173 = vmatprep.subr.mxu0 0.0
  %174 = vmatpush2.msra.mxu0 0.0
  %175 = vmatprep.subr.mxu0 0.0
  %176 = vmatpush2.msra.mxu0 0.0
  %177 = vmatprep.subr.mxu0 0.0
  %178 = vmatpush2.msra.mxu0 0.0
  %179 = vmatprep.subr.mxu0 0.0
  %180 = vmatpush2.msra.mxu0 0.0
  %181 = vmatprep.subr.mxu0 0.0
  %182 = vmatpush2.msra.mxu0 0.0
  %183 = vmatprep.subr.mxu0 0.0
  %184 = vmatpush2.msra.mxu0 0.0
  %185 = vmatprep.subr.mxu0 0.0
  %186 = vmatpush2.msra.mxu0 0.0
  %187 = vmatprep.subr.mxu0 0.0
  %188 = vmatpush2.msra.mxu0 0.0
  %189 = vmatprep.subr.mxu0 0.0
  %190 = vmatpush2.msra.mxu0 0.0
  %191 = vmatprep.subr.mxu0 0.0
  %192 = vmatpush2.msra.mxu0 0.0
  %193 = vmatprep.subr.mxu0 0.0
  %194 = vmatpush2.msra.mxu0 0.0
  %195 = vmatprep.mubr.f32.mxu0 0.0
  %196 = vmatmul.mubr.f32.gmra.mxu0 %v107
  %v197 = vpop.f32.mrf.mxu0
  %v198 = vadd.f32 %v129, %v197
  %v199 = vpop.f32.mrf.mxu0
  %200 = vdwg.mxu0
  %201 = vst.msk [vmem:[%s5] sm:$0xff] %vm29, %v198
  // Predicated region
  $region22: #{model1_forward.1} parent=0 // pred_check
    _
  $region23: #{model1_forward.1} parent=0 // pred_check_branch
    %203 = sbr.rel (0) target = $region25
  $region24: #{model1_forward.1} parent=0 // pred_region
    _
  $region25: #{model1_forward.1} parent=0 // pred_fallthru
    _
  // Predicated region
  $region26: #{model1_forward.1} parent=0 // pred_check
    _
  $region27: #{model1_forward.1} parent=0 // pred_check_branch
    %205 = sbr.rel (0) target = $region29
  $region28: #{model1_forward.1} parent=0 // pred_region
    _
  $region29: #{model1_forward.1} parent=0 // pred_fallthru
    _

</llo_original>
